<compile_context>
chip_gen: v7x
topology: tpu7x:2x2x1
jax: 0.10.0
libtpu: 0.0.40
codegen_flags: <defaults>
</compile_context>

<pallas_src>
import jax
import jax.numpy as jnp
from jax.experimental import pallas as pl
from jax.experimental.pallas import tpu as pltpu

LANES = 128
SUBLANES = 8
HIDDEN = 6


def _round_up(n, m):
    return ((n + m - 1) // m) * m


def mlp_kernel(params_ref, x_ref, o_ref):
    # params_ref: SMEM f32[19] = [w1(6), b1(6), w2(6), b2(1)]
    # x_ref / o_ref: VMEM (tile_rows, 128) lane-dense batch tiles.
    x = x_ref[...]
    b2 = params_ref[3 * HIDDEN]
    # Peel hidden unit 0 and fold in b2: removes the zeros-init and the final add.
    h0 = jnp.maximum(x * params_ref[0] + params_ref[HIDDEN], 0.0)
    acc = h0 * params_ref[2 * HIDDEN] + b2
    # Remaining 5 hidden units: unrolled broadcast-FMA on the VPU.
    for j in range(1, HIDDEN):
        w1j = params_ref[j]
        b1j = params_ref[HIDDEN + j]
        w2j = params_ref[2 * HIDDEN + j]
        acc = acc + jnp.maximum(x * w1j + b1j, 0.0) * w2j
    o_ref[...] = jnp.maximum(acc, 0.0)


def mlp_forward(x, w1, b1, w2, b2, *, tile_rows=4096):
    """x: (B, 1) f32; w1: (6, 1); b1: (6,); w2: (1, 6); b2: (1,). Returns (B, 1)."""
    B = x.shape[0]
    dtype = x.dtype

    # Pack the 19 scalars into one small SMEM vector.
    params = jnp.concatenate(
        [w1.reshape(-1), b1.reshape(-1), w2.reshape(-1), b2.reshape(-1)]
    ).astype(jnp.float32)

    # Lane-dense view: flatten the batch and view it as (rows, 128).  Pad only
    # to a whole number of (8, 128) sub-tiles -- NOT to a multiple of the
    # pipeline tile -- so the wrapper never adds a full extra HBM copy.
    rows = pl.cdiv(max(B, 1), LANES)
    rows8 = _round_up(rows, SUBLANES)
    padded = rows8 * LANES
    flat = x.reshape(-1)
    if padded != B:
        flat = jnp.pad(flat, (0, padded - B))
    x2d = flat.reshape(rows8, LANES)

    # Clamp the tile to the problem size so tiny batches don't DMA garbage ...
    tr = min(tile_rows, rows8)
    num_tiles = pl.cdiv(rows8, tr)
    # ... but keep >= 2 "parallel" grid steps when there is enough work, so
    # both TensorCores stay busy on v7x (single-TC chips are unaffected).
    if num_tiles == 1 and rows8 >= 2 * SUBLANES:
        tr = _round_up(pl.cdiv(rows8, 2), SUBLANES)
        num_tiles = pl.cdiv(rows8, tr)

    out2d = pl.pallas_call(
        mlp_kernel,
        out_shape=jax.ShapeDtypeStruct((rows8, LANES), dtype),
        grid=(num_tiles,),
        in_specs=[
            # 19 scalars: whole array, grid-invariant, lives in SMEM.
            pl.BlockSpec(memory_space=pltpu.MemorySpace.SMEM),
            # Ragged last block is fine: the op is purely elementwise and the
            # padded tail is discarded below.
            pl.BlockSpec((tr, LANES), lambda i: (i, 0)),
        ],
        out_specs=pl.BlockSpec((tr, LANES), lambda i: (i, 0)),
        compiler_params=pltpu.CompilerParams(
            dimension_semantics=("parallel",),
            # Max tile = 4096x128 f32 = 2 MiB; 2 input bufs + 2 output bufs
            # = 8 MiB, comfortably inside 32 MiB on v5e/v6e/v7x.
            vmem_limit_bytes=32 * 1024 * 1024,
        ),
    )(params, x2d)

    out_flat = out2d.reshape(-1)
    if padded != B:
        out_flat = out_flat[:B]
    return out_flat.reshape(B, 1)


def init_params(key):
    """torch.nn.Linear default init: U(-1/sqrt(fan_in), 1/sqrt(fan_in))."""
    k1, k2, k3, k4 = jax.random.split(key, 4)
    bound1 = 1.0 / jnp.sqrt(1.0)   # l1: fan_in = 1
    bound2 = 1.0 / jnp.sqrt(6.0)   # l2: fan_in = 6
    w1 = jax.random.uniform(k1, (6, 1), jnp.float32, -bound1, bound1)
    b1 = jax.random.uniform(k2, (6,), jnp.float32, -bound1, bound1)
    w2 = jax.random.uniform(k3, (1, 6), jnp.float32, -bound2, bound2)
    b2 = jax.random.uniform(k4, (1,), jnp.float32, -bound2, bound2)
    return w1, b1, w2, b2


def _reference(x, w1, b1, w2, b2):
    h = jnp.maximum(x @ w1.T + b1, 0.0)
    return jnp.maximum(h @ w2.T + b2, 0.0)


if __name__ == "__main__":
    key = jax.random.PRNGKey(0)
    kx, kp, kx2 = jax.random.split(key, 3)
    w1, b1, w2, b2 = init_params(kp)

    # Small batch (single tiny tile path).
    B = 8
    x = jax.random.normal(kx, (B, 1), jnp.float32)
    out = jax.block_until_ready(mlp_forward(x, w1, b1, w2, b2))
    y_ref = _reference(x, w1, b1, w2, b2)
    assert out.shape == (B, 1)
    assert jnp.allclose(out, y_ref, atol=1e-6, rtol=1e-5)

    # Misaligned batch (exercises padding + multi-step grid + ragged last block).
    B2 = 3000
    x2 = jax.random.normal(kx2, (B2, 1), jnp.float32)
    out2 = jax.block_until_ready(mlp_forward(x2, w1, b1, w2, b2))
    y_ref2 = _reference(x2, w1, b1, w2, b2)
    assert out2.shape == (B2, 1)
    assert jnp.allclose(out2, y_ref2, atol=1e-6, rtol=1e-5)

    print("KERNEL_OK")
</pallas_src>

<mosaic_0001>
module attributes {stable_mosaic.version = 11 : i64} {
  func.func @mlp_kernel(%arg0: i32, %arg1: memref<19xf32, #tpu.memory_space<smem>>, %arg2: memref<8x128xf32, #tpu.memory_space<vmem>>, %arg3: memref<8x128xf32, #tpu.memory_space<vmem>>) attributes {dimension_semantics = [#tpu.dimension_semantics<parallel>], iteration_bounds = array<i64: 1>, scalar_prefetch = 0 : i64, scratch_operands = 0 : i64, tpu.core_type = #tpu.core_type<tc>, window_params = [{transform_indices = @transform_0, window_bounds = array<i64: 19>}, {transform_indices = @transform_1, window_bounds = array<i64: 8, 128>}, {transform_indices = @transform_2, window_bounds = array<i64: 8, 128>}]} {
    %c0 = arith.constant 0 : index
    %c0_0 = arith.constant 0 : index
    %0 = vector.load %arg2[%c0, %c0_0] : memref<8x128xf32, #tpu.memory_space<vmem>>, vector<8x128xf32>
    %c18 = arith.constant 18 : index
    %1 = memref.load %arg1[%c18] : memref<19xf32, #tpu.memory_space<smem>>
    %c0_1 = arith.constant 0 : index
    %2 = memref.load %arg1[%c0_1] : memref<19xf32, #tpu.memory_space<smem>>
    %3 = vector.broadcast %2 : f32 to vector<8x128xf32>
    %4 = arith.mulf %0, %3 : vector<8x128xf32>
    %c6 = arith.constant 6 : index
    %5 = memref.load %arg1[%c6] : memref<19xf32, #tpu.memory_space<smem>>
    %6 = vector.broadcast %5 : f32 to vector<8x128xf32>
    %7 = arith.addf %4, %6 : vector<8x128xf32>
    %cst = arith.constant 0.000000e+00 : f32
    %8 = vector.broadcast %cst : f32 to vector<8x128xf32>
    %9 = arith.maximumf %7, %8 : vector<8x128xf32>
    %c12 = arith.constant 12 : index
    %10 = memref.load %arg1[%c12] : memref<19xf32, #tpu.memory_space<smem>>
    %11 = vector.broadcast %10 : f32 to vector<8x128xf32>
    %12 = arith.mulf %9, %11 : vector<8x128xf32>
    %13 = vector.broadcast %1 : f32 to vector<8x128xf32>
    %14 = arith.addf %12, %13 : vector<8x128xf32>
    %c1 = arith.constant 1 : index
    %15 = memref.load %arg1[%c1] : memref<19xf32, #tpu.memory_space<smem>>
    %c7 = arith.constant 7 : index
    %16 = memref.load %arg1[%c7] : memref<19xf32, #tpu.memory_space<smem>>
    %c13 = arith.constant 13 : index
    %17 = memref.load %arg1[%c13] : memref<19xf32, #tpu.memory_space<smem>>
    %18 = vector.broadcast %15 : f32 to vector<8x128xf32>
    %19 = arith.mulf %0, %18 : vector<8x128xf32>
    %20 = vector.broadcast %16 : f32 to vector<8x128xf32>
    %21 = arith.addf %19, %20 : vector<8x128xf32>
    %cst_2 = arith.constant 0.000000e+00 : f32
    %22 = vector.broadcast %cst_2 : f32 to vector<8x128xf32>
    %23 = arith.maximumf %21, %22 : vector<8x128xf32>
    %24 = vector.broadcast %17 : f32 to vector<8x128xf32>
    %25 = arith.mulf %23, %24 : vector<8x128xf32>
    %26 = arith.addf %14, %25 : vector<8x128xf32>
    %c2 = arith.constant 2 : index
    %27 = memref.load %arg1[%c2] : memref<19xf32, #tpu.memory_space<smem>>
    %c8 = arith.constant 8 : index
    %28 = memref.load %arg1[%c8] : memref<19xf32, #tpu.memory_space<smem>>
    %c14 = arith.constant 14 : index
    %29 = memref.load %arg1[%c14] : memref<19xf32, #tpu.memory_space<smem>>
    %30 = vector.broadcast %27 : f32 to vector<8x128xf32>
    %31 = arith.mulf %0, %30 : vector<8x128xf32>
    %32 = vector.broadcast %28 : f32 to vector<8x128xf32>
    %33 = arith.addf %31, %32 : vector<8x128xf32>
    %cst_3 = arith.constant 0.000000e+00 : f32
    %34 = vector.broadcast %cst_3 : f32 to vector<8x128xf32>
    %35 = arith.maximumf %33, %34 : vector<8x128xf32>
    %36 = vector.broadcast %29 : f32 to vector<8x128xf32>
    %37 = arith.mulf %35, %36 : vector<8x128xf32>
    %38 = arith.addf %26, %37 : vector<8x128xf32>
    %c3 = arith.constant 3 : index
    %39 = memref.load %arg1[%c3] : memref<19xf32, #tpu.memory_space<smem>>
    %c9 = arith.constant 9 : index
    %40 = memref.load %arg1[%c9] : memref<19xf32, #tpu.memory_space<smem>>
    %c15 = arith.constant 15 : index
    %41 = memref.load %arg1[%c15] : memref<19xf32, #tpu.memory_space<smem>>
    %42 = vector.broadcast %39 : f32 to vector<8x128xf32>
    %43 = arith.mulf %0, %42 : vector<8x128xf32>
    %44 = vector.broadcast %40 : f32 to vector<8x128xf32>
    %45 = arith.addf %43, %44 : vector<8x128xf32>
    %cst_4 = arith.constant 0.000000e+00 : f32
    %46 = vector.broadcast %cst_4 : f32 to vector<8x128xf32>
    %47 = arith.maximumf %45, %46 : vector<8x128xf32>
    %48 = vector.broadcast %41 : f32 to vector<8x128xf32>
    %49 = arith.mulf %47, %48 : vector<8x128xf32>
    %50 = arith.addf %38, %49 : vector<8x128xf32>
    %c4 = arith.constant 4 : index
    %51 = memref.load %arg1[%c4] : memref<19xf32, #tpu.memory_space<smem>>
    %c10 = arith.constant 10 : index
    %52 = memref.load %arg1[%c10] : memref<19xf32, #tpu.memory_space<smem>>
    %c16 = arith.constant 16 : index
    %53 = memref.load %arg1[%c16] : memref<19xf32, #tpu.memory_space<smem>>
    %54 = vector.broadcast %51 : f32 to vector<8x128xf32>
    %55 = arith.mulf %0, %54 : vector<8x128xf32>
    %56 = vector.broadcast %52 : f32 to vector<8x128xf32>
    %57 = arith.addf %55, %56 : vector<8x128xf32>
    %cst_5 = arith.constant 0.000000e+00 : f32
    %58 = vector.broadcast %cst_5 : f32 to vector<8x128xf32>
    %59 = arith.maximumf %57, %58 : vector<8x128xf32>
    %60 = vector.broadcast %53 : f32 to vector<8x128xf32>
    %61 = arith.mulf %59, %60 : vector<8x128xf32>
    %62 = arith.addf %50, %61 : vector<8x128xf32>
    %c5 = arith.constant 5 : index
    %63 = memref.load %arg1[%c5] : memref<19xf32, #tpu.memory_space<smem>>
    %c11 = arith.constant 11 : index
    %64 = memref.load %arg1[%c11] : memref<19xf32, #tpu.memory_space<smem>>
    %c17 = arith.constant 17 : index
    %65 = memref.load %arg1[%c17] : memref<19xf32, #tpu.memory_space<smem>>
    %66 = vector.broadcast %63 : f32 to vector<8x128xf32>
    %67 = arith.mulf %0, %66 : vector<8x128xf32>
    %68 = vector.broadcast %64 : f32 to vector<8x128xf32>
    %69 = arith.addf %67, %68 : vector<8x128xf32>
    %cst_6 = arith.constant 0.000000e+00 : f32
    %70 = vector.broadcast %cst_6 : f32 to vector<8x128xf32>
    %71 = arith.maximumf %69, %70 : vector<8x128xf32>
    %72 = vector.broadcast %65 : f32 to vector<8x128xf32>
    %73 = arith.mulf %71, %72 : vector<8x128xf32>
    %74 = arith.addf %62, %73 : vector<8x128xf32>
    %cst_7 = arith.constant 0.000000e+00 : f32
    %75 = vector.broadcast %cst_7 : f32 to vector<8x128xf32>
    %76 = arith.maximumf %74, %75 : vector<8x128xf32>
    %c0_8 = arith.constant 0 : index
    %c0_9 = arith.constant 0 : index
    %77 = vector.load %arg3[%c0_8, %c0_9] : memref<8x128xf32, #tpu.memory_space<vmem>>, vector<8x128xf32>
    tpu.vector_store %arg3[%c0_8, %c0_9], %76 {strides = array<i32>} : memref<8x128xf32, #tpu.memory_space<vmem>>, vector<8x128xf32>,
    return
  }
  func.func @transform_0(%arg0: i32) -> i32 {
    %c0_i32 = arith.constant 0 : i32
    %c0_i32_0 = arith.constant 0 : i32
    return %c0_i32 : i32
  }
  func.func @transform_1(%arg0: i32) -> (i32, i32) {
    %c0_i32 = arith.constant 0 : i32
    %c0_i32_0 = arith.constant 0 : i32
    return %arg0, %c0_i32 : i32, i32
  }
  func.func @transform_2(%arg0: i32) -> (i32, i32) {
    %c0_i32 = arith.constant 0 : i32
    %c0_i32_0 = arith.constant 0 : i32
    return %arg0, %c0_i32 : i32, i32
  }
}

</mosaic_0001>

<llo_original>
// kernel: tpu_custom_call.1
$region0: #{tpu_custom_call.1}
  #allocation0 [shape = 'u32[]', space=smem, size = 0x4, offset = 0x4, fixed_abs, tag = 'smem constant byte address 0x4 - core index']
  #allocation1 [shape = 'u32[144,128]{1,0:T(1,128)}', space=vmem, size = 0x12000, scoped, tag = 'internal scratch']
  %s0 = inlined_call_operand.hbm [shape: f32[19], index: 0, kind: input, shape index: {}]
  %s1 = inlined_call_operand.hbm [shape: f32[8,128], index: 1, kind: input, shape index: {}]
  %s2 = inlined_call_operand.hbm [shape: f32[8,128], index: 2, kind: output, shape index: {}]
  %s3 = sld [smem:[#allocation0]]
  $region26: #{tpu_custom_call.1} parent=0
    _
  %s5 = ssub.s32 1, %s3
  %s6 = scalar_select 0, %s5, %s3
  $region1: #{tpu_custom_call.1} parent=0
    #allocation2 [shape = 'u8[512]{0}', space=smem, size = 0x200, scoped, tag = 'input window, operand 0, single buffered']
    #allocation3 [shape = 's32[1]{0}', space=sflag, size = 0x4, scoped, tag = 'scoped memory for tpu_custom_call.1']
    #allocation4 [shape = 's32[1]{0}', space=sflag, size = 0x4, scoped, tag = 'scoped memory for tpu_custom_call.1']
    #allocation5 [shape = 's32[1]{0}', space=sflag, size = 0x4, scoped, tag = 'scoped memory for tpu_custom_call.1']
    #allocation6 [shape = 'u8[4096]{0}', space=vmem, size = 0x1000, scoped, tag = 'input window, operand 1, single buffered']
    #allocation7 [shape = 'u8[4096]{0}', space=vmem, size = 0x1000, scoped, tag = 'output window, operand 0, single buffered']
    %7 = vsyncpa [#allocation5], 0
    %8 = vsyncpa [#allocation3], 0
    %9 = vsyncpa [#allocation4], 0
    // Predicated region
    $region2: #{tpu_custom_call.1} parent=1 // pred_check
      _
    $region3: #{tpu_custom_call.1} parent=1 // pred_check_branch
      %11 = sbr.rel (0) target = $region5
    $region4: #{tpu_custom_call.1} parent=1 // pred_region
      %s13 = ssub.s32 16, 16
      %14 = vsyncadd [#allocation5], %s13
      %17 = dma.hbm_to_smem %s0, 16, [#allocation2], [#allocation5]
    $region5: #{tpu_custom_call.1} parent=1 // pred_fallthru
      _
    // Predicated region
    $region6: #{tpu_custom_call.1} parent=1 // pred_check
      _
    $region7: #{tpu_custom_call.1} parent=1 // pred_check_branch
      %19 = sbr.rel (0) target = $region9
    $region8: #{tpu_custom_call.1} parent=1 // pred_region
      %s21 = ssub.s32 128, 128
      %22 = vsyncadd [#allocation3], %s21
      %s24 = sshll.u32 [#allocation6], 4
      %s25 = int_to_ptr.vmem [resolvable:$true] %s24
      %27 = dma.hbm_to_vmem [thread:$0]  %s1, 128, %s25, [#allocation3]
    $region9: #{tpu_custom_call.1} parent=1 // pred_fallthru
      _
    // Predicated region
    $region10: #{tpu_custom_call.1} parent=1 // pred_check
      _
    $region11: #{tpu_custom_call.1} parent=1 // pred_check_branch
      %29 = sbr.rel (0) target = $region13
    $region12: #{tpu_custom_call.1} parent=1 // pred_region
      %30 = dma.done [#allocation5], 16
    $region13: #{tpu_custom_call.1} parent=1 // pred_fallthru
      _
    // Predicated region
    $region14: #{tpu_custom_call.1} parent=1 // pred_check
      _
    $region15: #{tpu_custom_call.1} parent=1 // pred_check_branch
      %32 = sbr.rel (0) target = $region17
    $region16: #{tpu_custom_call.1} parent=1 // pred_region
      %33 = dma.done [#allocation3], 128
    $region17: #{tpu_custom_call.1} parent=1 // pred_fallthru
      _
    %34 = sfence
    %v35 = vld [vmem:[#allocation6] sm:$0xff]
    %s36 = sld [smem:[#allocation2 + $0x12]]
    %s37 = sld [smem:[#allocation2]]
    %v38 = vstv %s37
    %v39 = vmul.f32 %v35, %v38
    %s40 = sld [smem:[#allocation2 + $0x6]]
    %v41 = vstv %s40
    %v42 = vadd.f32 %v39, %v41
    %v43 = vmax.f32 %v42, 0.0
    %s44 = sld [smem:[#allocation2 + $0xc]]
    %v45 = vstv %s44
    %v46 = vmul.f32 %v43, %v45
    %v47 = vstv %s36
    %v48 = vadd.f32 %v46, %v47
    %s49 = sld [smem:[#allocation2 + $0x1]]
    %s50 = sld [smem:[#allocation2 + $0x7]]
    %s51 = sld [smem:[#allocation2 + $0xd]]
    %v52 = vstv %s49
    %v53 = vmul.f32 %v35, %v52
    %v54 = vstv %s50
    %v55 = vadd.f32 %v53, %v54
    %v56 = vmax.f32 %v55, 0.0
    %v57 = vstv %s51
    %v58 = vmul.f32 %v56, %v57
    %v59 = vadd.f32 %v48, %v58
    %s60 = sld [smem:[#allocation2 + $0x2]]
    %s61 = sld [smem:[#allocation2 + $0x8]]
    %s62 = sld [smem:[#allocation2 + $0xe]]
    %v63 = vstv %s60
    %v64 = vmul.f32 %v35, %v63
    %v65 = vstv %s61
    %v66 = vadd.f32 %v64, %v65
    %v67 = vmax.f32 %v66, 0.0
    %v68 = vstv %s62
    %v69 = vmul.f32 %v67, %v68
    %v70 = vadd.f32 %v59, %v69
    %s71 = sld [smem:[#allocation2 + $0x3]]
    %s72 = sld [smem:[#allocation2 + $0x9]]
    %s73 = sld [smem:[#allocation2 + $0xf]]
    %v74 = vstv %s71
    %v75 = vmul.f32 %v35, %v74
    %v76 = vstv %s72
    %v77 = vadd.f32 %v75, %v76
    %v78 = vmax.f32 %v77, 0.0
    %v79 = vstv %s73
    %v80 = vmul.f32 %v78, %v79
    %v81 = vadd.f32 %v70, %v80
    %s82 = sld [smem:[#allocation2 + $0x4]]
    %s83 = sld [smem:[#allocation2 + $0xa]]
    %s84 = sld [smem:[#allocation2 + $0x10]]
    %v85 = vstv %s82
    %v86 = vmul.f32 %v35, %v85
    %v87 = vstv %s83
    %v88 = vadd.f32 %v86, %v87
    %v89 = vmax.f32 %v88, 0.0
    %v90 = vstv %s84
    %v91 = vmul.f32 %v89, %v90
    %v92 = vadd.f32 %v81, %v91
    %s93 = sld [smem:[#allocation2 + $0x5]]
    %s94 = sld [smem:[#allocation2 + $0xb]]
    %s95 = sld [smem:[#allocation2 + $0x11]]
    %v96 = vstv %s93
    %v97 = vmul.f32 %v35, %v96
    %v98 = vstv %s94
    %v99 = vadd.f32 %v97, %v98
    %v100 = vmax.f32 %v99, 0.0
    %v101 = vstv %s95
    %v102 = vmul.f32 %v100, %v101
    %v103 = vadd.f32 %v92, %v102
    %v104 = vmax.f32 %v103, 0.0
    %105 = vst [vmem:[#allocation7] sm:$0xff] %v104
    // Predicated region
    $region18: #{tpu_custom_call.1} parent=1 // pred_check
      _
    $region19: #{tpu_custom_call.1} parent=1 // pred_check_branch
      %107 = sbr.rel (0) target = $region21
    $region20: #{tpu_custom_call.1} parent=1 // pred_region
      %s109 = ssub.s32 128, 128
      %110 = vsyncadd [#allocation4], %s109
      %s112 = sshll.u32 [#allocation7], 4
      %s113 = int_to_ptr.vmem [resolvable:$true] %s112
      %115 = dma.vmem_to_hbm [thread:$0]  %s113, 128, %s2, [#allocation4]
    $region21: #{tpu_custom_call.1} parent=1 // pred_fallthru
      _
    // Predicated region
    $region22: #{tpu_custom_call.1} parent=1 // pred_check
      _
    $region23: #{tpu_custom_call.1} parent=1 // pred_check_branch
      %117 = sbr.rel (0) target = $region25
    $region24: #{tpu_custom_call.1} parent=1 // pred_region
      %118 = dma.done [#allocation4], 128
    $region25: #{tpu_custom_call.1} parent=1 // pred_fallthru
      _
    %119 = vsyncpa [#allocation3], 1
    %120 = vsyncpa [#allocation4], 1
    %121 = vsyncpa [#allocation5], 1

</llo_original>
